<compile_context>
chip_gen: v7x
topology: tpu7x:2x2x1
jax: 0.10.0
libtpu: 0.0.40
codegen_flags: <defaults>
</compile_context>

<pallas_src>
import functools

import jax
import jax.numpy as jnp
from jax.experimental import pallas as pl
from jax.experimental.pallas import tpu as pltpu


def _mlp_kernel(x_ref, w1_ref, w2_ref, w3_ref, vec_ref, out_ref,
                *, apply_bn: bool, eps: float,
                hidden: int, h2: int, n_actions: int):
    x = x_ref[...].astype(jnp.float32)

    # Packed small params: one VMEM tile, sliced for free inside the kernel.
    # rows: 0=b1, 1=gamma1, 2=beta1, 3=b2, 4=gamma2, 5=beta2, 6=b3
    vec = vec_ref[...]
    b1, g1, bt1 = vec[0:1, :hidden], vec[1:2, :hidden], vec[2:3, :hidden]
    b2, g2, bt2 = vec[3:4, :h2], vec[4:5, :h2], vec[5:6, :h2]
    b3 = vec[6:7, :n_actions]

    def bn(h, gamma, beta):
        # Fused single-pass stats: mean and E[h^2] together,
        # biased variance = E[h^2] - mean^2 (training-mode BatchNorm1d).
        mean = jnp.mean(h, axis=0, keepdims=True)
        ex2 = jnp.mean(h * h, axis=0, keepdims=True)
        var = ex2 - mean * mean
        return (h - mean) * jax.lax.rsqrt(var + eps) * gamma + beta

    # ---- fc1 (+ bn1 + relu; dropout1 = identity) ----
    h = jnp.dot(x, w1_ref[...], preferred_element_type=jnp.float32) + b1
    if apply_bn:
        h = bn(h, g1, bt1)
    h = jnp.maximum(h, 0.0)

    # ---- fc2 (+ bn2 + relu; dropout2 = identity) ----
    h = jnp.dot(h, w2_ref[...], preferred_element_type=jnp.float32) + b2
    if apply_bn:
        h = bn(h, g2, bt2)
    h = jnp.maximum(h, 0.0)

    # ---- fc3 + softmax over last axis ----
    logits = jnp.dot(h, w3_ref[...], preferred_element_type=jnp.float32) + b3
    m = jnp.max(logits, axis=-1, keepdims=True)
    e = jnp.exp(logits - m)
    # approx=False keeps softmax rows summing to 1 within 1e-5.
    out_ref[...] = e * pl.reciprocal(jnp.sum(e, axis=-1, keepdims=True),
                                     approx=False)


@jax.jit
def mc_reinforce_forward(x, params):
    """Runs the MC_REINFORCE_network forward pass in a single Pallas kernel."""
    w1, w2, w3, vec = params
    B = x.shape[0]
    hidden = w1.shape[1]
    h2 = w2.shape[1]
    n_actions = w3.shape[1]

    kernel = functools.partial(
        _mlp_kernel, apply_bn=(B > 1), eps=1e-5,
        hidden=hidden, h2=h2, n_actions=n_actions)

    vmem = pl.BlockSpec(memory_space=pltpu.MemorySpace.VMEM)
    return pl.pallas_call(
        kernel,
        out_shape=jax.ShapeDtypeStruct((B, n_actions), jnp.float32),
        in_specs=[vmem] * 5,
        out_specs=vmem,
        compiler_params=pltpu.CompilerParams(
            vmem_limit_bytes=32 * 1024 * 1024),
    )(x, w1, w2, w3, vec)


def init_params(key, n_observations, hidden_size, n_actions):
    """Deterministic Xavier-uniform weights, zero biases, BN gamma=1 beta=0.

    Returns (w1, w2, w3, vec_pack) where vec_pack is the (7, width) stack of
    [b1, gamma1, beta1, b2, gamma2, beta2, b3], each row right-padded to
    width = max(hidden, hidden//2, n_actions).
    """
    h2 = hidden_size // 2
    width = max(hidden_size, h2, n_actions)

    def xavier(k, fan_in, fan_out):
        bound = jnp.sqrt(6.0 / (fan_in + fan_out))
        # stored as [in, out] so the kernel does x @ W
        return jax.random.uniform(k, (fan_in, fan_out), jnp.float32, -bound, bound)

    k1, k2, k3 = jax.random.split(key, 3)
    w1 = xavier(k1, n_observations, hidden_size)
    w2 = xavier(k2, hidden_size, h2)
    w3 = xavier(k3, h2, n_actions)

    def row(v):
        return jnp.pad(v.reshape(1, -1), ((0, 0), (0, width - v.shape[-1])))

    vec = jnp.concatenate([
        row(jnp.zeros((hidden_size,), jnp.float32)),   # b1
        row(jnp.ones((hidden_size,), jnp.float32)),    # gamma1
        row(jnp.zeros((hidden_size,), jnp.float32)),   # beta1
        row(jnp.zeros((h2,), jnp.float32)),            # b2
        row(jnp.ones((h2,), jnp.float32)),             # gamma2
        row(jnp.zeros((h2,), jnp.float32)),            # beta2
        row(jnp.zeros((n_actions,), jnp.float32)),     # b3
    ], axis=0)

    return (w1, w2, w3, vec)


def _reference_forward(x, params, eps=1e-5):
    """Pure-JAX reference (same semantics) for a sanity check."""
    w1, w2, w3, vec = params
    hidden, h2, n_actions = w1.shape[1], w2.shape[1], w3.shape[1]
    b1, g1, bt1 = vec[0, :hidden], vec[1, :hidden], vec[2, :hidden]
    b2, g2, bt2 = vec[3, :h2], vec[4, :h2], vec[5, :h2]
    b3 = vec[6, :n_actions]

    h = x.astype(jnp.float32) @ w1 + b1
    if x.shape[0] > 1:
        m, v = jnp.mean(h, 0, keepdims=True), jnp.var(h, 0, keepdims=True)
        h = (h - m) / jnp.sqrt(v + eps) * g1 + bt1
    h = jnp.maximum(h, 0.0)
    h = h @ w2 + b2
    if x.shape[0] > 1:
        m, v = jnp.mean(h, 0, keepdims=True), jnp.var(h, 0, keepdims=True)
        h = (h - m) / jnp.sqrt(v + eps) * g2 + bt2
    h = jnp.maximum(h, 0.0)
    logits = h @ w3 + b3
    return jax.nn.softmax(logits, axis=-1)


if __name__ == "__main__":
    # Small CartPole-like shapes: 4 observations, 32 hidden units, 2 actions.
    n_observations, hidden_size, n_actions = 4, 32, 2
    batch = 8

    key = jax.random.PRNGKey(0)
    k_params, k_x = jax.random.split(key)
    params = init_params(k_params, n_observations, hidden_size, n_actions)
    x = jax.random.normal(k_x, (batch, n_observations), jnp.float32)

    probs = mc_reinforce_forward(x, params)
    probs = jax.block_until_ready(probs)

    ref = _reference_forward(x, params)
    assert probs.shape == (batch, n_actions)
    assert jnp.allclose(jnp.sum(probs, axis=-1), 1.0, atol=1e-5)
    # Kernel uses the fused E[h^2]-mean^2 variance form; allow a hair of slack.
    assert jnp.allclose(probs, ref, atol=2e-5, rtol=1e-4)

    print("KERNEL_OK")
</pallas_src>

<mosaic_0001>
module attributes {stable_mosaic.version = 11 : i64} {
  func.func @_mlp_kernel(%arg0: memref<8x4xf32, #tpu.memory_space<vmem>>, %arg1: memref<4x32xf32, #tpu.memory_space<vmem>>, %arg2: memref<32x16xf32, #tpu.memory_space<vmem>>, %arg3: memref<16x2xf32, #tpu.memory_space<vmem>>, %arg4: memref<7x32xf32, #tpu.memory_space<vmem>>, %arg5: memref<8x2xf32, #tpu.memory_space<vmem>>) attributes {dimension_semantics = [], scalar_prefetch = 0 : i64, scratch_operands = 0 : i64, tpu.core_type = #tpu.core_type<tc>} {
    %c0 = arith.constant 0 : index
    %c0_0 = arith.constant 0 : index
    %0 = vector.load %arg0[%c0, %c0_0] : memref<8x4xf32, #tpu.memory_space<vmem>>, vector<8x4xf32>
    %c0_1 = arith.constant 0 : index
    %c0_2 = arith.constant 0 : index
    %1 = vector.load %arg4[%c0_1, %c0_2] : memref<7x32xf32, #tpu.memory_space<vmem>>, vector<7x32xf32>
    %2 = vector.extract_strided_slice %1 {offsets = [0, 0], sizes = [1, 32], strides = [1, 1]} : vector<7x32xf32> to vector<1x32xf32>
    %3 = vector.extract_strided_slice %1 {offsets = [1, 0], sizes = [1, 32], strides = [1, 1]} : vector<7x32xf32> to vector<1x32xf32>
    %4 = vector.extract_strided_slice %1 {offsets = [2, 0], sizes = [1, 32], strides = [1, 1]} : vector<7x32xf32> to vector<1x32xf32>
    %5 = vector.extract_strided_slice %1 {offsets = [3, 0], sizes = [1, 16], strides = [1, 1]} : vector<7x32xf32> to vector<1x16xf32>
    %6 = vector.extract_strided_slice %1 {offsets = [4, 0], sizes = [1, 16], strides = [1, 1]} : vector<7x32xf32> to vector<1x16xf32>
    %7 = vector.extract_strided_slice %1 {offsets = [5, 0], sizes = [1, 16], strides = [1, 1]} : vector<7x32xf32> to vector<1x16xf32>
    %8 = vector.extract_strided_slice %1 {offsets = [6, 0], sizes = [1, 2], strides = [1, 1]} : vector<7x32xf32> to vector<1x2xf32>
    %c0_3 = arith.constant 0 : index
    %c0_4 = arith.constant 0 : index
    %9 = vector.load %arg1[%c0_3, %c0_4] : memref<4x32xf32, #tpu.memory_space<vmem>>, vector<4x32xf32>
    %cst = arith.constant dense<0.000000e+00> : vector<8x32xf32>
    %10 = tpu.matmul %0, %9, %cst {dimension_numbers = #tpu.dot_dimension_numbers<[1], [0], [0], [1], [0, 0, 1, 1], [], []>} : vector<8x4xf32>, vector<4x32xf32>, vector<8x32xf32> -> vector<8x32xf32>
    %11 = vector.broadcast %2 : vector<1x32xf32> to vector<8x32xf32>
    %12 = arith.addf %10, %11 : vector<8x32xf32>
    %cst_5 = arith.constant dense<0.000000e+00> : vector<32xf32>
    %13 = vector.multi_reduction <add>, %12, %cst_5 [0] : vector<8x32xf32> to vector<32xf32>
    %14 = vector.shape_cast %13 : vector<32xf32> to vector<1x32xf32>
    %cst_6 = arith.constant 8.000000e+00 : f32
    %15 = vector.broadcast %cst_6 : f32 to vector<1x32xf32>
    %16 = arith.divf %14, %15 : vector<1x32xf32>
    %17 = arith.mulf %12, %12 : vector<8x32xf32>
    %cst_7 = arith.constant dense<0.000000e+00> : vector<32xf32>
    %18 = vector.multi_reduction <add>, %17, %cst_7 [0] : vector<8x32xf32> to vector<32xf32>
    %19 = vector.shape_cast %18 : vector<32xf32> to vector<1x32xf32>
    %cst_8 = arith.constant 8.000000e+00 : f32
    %20 = vector.broadcast %cst_8 : f32 to vector<1x32xf32>
    %21 = arith.divf %19, %20 : vector<1x32xf32>
    %22 = arith.mulf %16, %16 : vector<1x32xf32>
    %23 = arith.subf %21, %22 : vector<1x32xf32>
    %24 = vector.broadcast %16 : vector<1x32xf32> to vector<8x32xf32>
    %25 = arith.subf %12, %24 : vector<8x32xf32>
    %cst_9 = arith.constant 9.99999974E-6 : f32
    %26 = vector.broadcast %cst_9 : f32 to vector<1x32xf32>
    %27 = arith.addf %23, %26 : vector<1x32xf32>
    %28 = math.rsqrt %27 : vector<1x32xf32>
    %29 = vector.broadcast %28 : vector<1x32xf32> to vector<8x32xf32>
    %30 = arith.mulf %25, %29 : vector<8x32xf32>
    %31 = vector.broadcast %3 : vector<1x32xf32> to vector<8x32xf32>
    %32 = arith.mulf %30, %31 : vector<8x32xf32>
    %33 = vector.broadcast %4 : vector<1x32xf32> to vector<8x32xf32>
    %34 = arith.addf %32, %33 : vector<8x32xf32>
    %cst_10 = arith.constant 0.000000e+00 : f32
    %35 = vector.broadcast %cst_10 : f32 to vector<8x32xf32>
    %36 = arith.maximumf %34, %35 : vector<8x32xf32>
    %c0_11 = arith.constant 0 : index
    %c0_12 = arith.constant 0 : index
    %37 = vector.load %arg2[%c0_11, %c0_12] : memref<32x16xf32, #tpu.memory_space<vmem>>, vector<32x16xf32>
    %cst_13 = arith.constant dense<0.000000e+00> : vector<8x16xf32>
    %38 = tpu.matmul %36, %37, %cst_13 {dimension_numbers = #tpu.dot_dimension_numbers<[1], [0], [0], [1], [0, 0, 1, 1], [], []>} : vector<8x32xf32>, vector<32x16xf32>, vector<8x16xf32> -> vector<8x16xf32>
    %39 = vector.broadcast %5 : vector<1x16xf32> to vector<8x16xf32>
    %40 = arith.addf %38, %39 : vector<8x16xf32>
    %cst_14 = arith.constant dense<0.000000e+00> : vector<16xf32>
    %41 = vector.multi_reduction <add>, %40, %cst_14 [0] : vector<8x16xf32> to vector<16xf32>
    %42 = vector.shape_cast %41 : vector<16xf32> to vector<1x16xf32>
    %cst_15 = arith.constant 8.000000e+00 : f32
    %43 = vector.broadcast %cst_15 : f32 to vector<1x16xf32>
    %44 = arith.divf %42, %43 : vector<1x16xf32>
    %45 = arith.mulf %40, %40 : vector<8x16xf32>
    %cst_16 = arith.constant dense<0.000000e+00> : vector<16xf32>
    %46 = vector.multi_reduction <add>, %45, %cst_16 [0] : vector<8x16xf32> to vector<16xf32>
    %47 = vector.shape_cast %46 : vector<16xf32> to vector<1x16xf32>
    %cst_17 = arith.constant 8.000000e+00 : f32
    %48 = vector.broadcast %cst_17 : f32 to vector<1x16xf32>
    %49 = arith.divf %47, %48 : vector<1x16xf32>
    %50 = arith.mulf %44, %44 : vector<1x16xf32>
    %51 = arith.subf %49, %50 : vector<1x16xf32>
    %52 = vector.broadcast %44 : vector<1x16xf32> to vector<8x16xf32>
    %53 = arith.subf %40, %52 : vector<8x16xf32>
    %cst_18 = arith.constant 9.99999974E-6 : f32
    %54 = vector.broadcast %cst_18 : f32 to vector<1x16xf32>
    %55 = arith.addf %51, %54 : vector<1x16xf32>
    %56 = math.rsqrt %55 : vector<1x16xf32>
    %57 = vector.broadcast %56 : vector<1x16xf32> to vector<8x16xf32>
    %58 = arith.mulf %53, %57 : vector<8x16xf32>
    %59 = vector.broadcast %6 : vector<1x16xf32> to vector<8x16xf32>
    %60 = arith.mulf %58, %59 : vector<8x16xf32>
    %61 = vector.broadcast %7 : vector<1x16xf32> to vector<8x16xf32>
    %62 = arith.addf %60, %61 : vector<8x16xf32>
    %cst_19 = arith.constant 0.000000e+00 : f32
    %63 = vector.broadcast %cst_19 : f32 to vector<8x16xf32>
    %64 = arith.maximumf %62, %63 : vector<8x16xf32>
    %c0_20 = arith.constant 0 : index
    %c0_21 = arith.constant 0 : index
    %65 = vector.load %arg3[%c0_20, %c0_21] : memref<16x2xf32, #tpu.memory_space<vmem>>, vector<16x2xf32>
    %cst_22 = arith.constant dense<0.000000e+00> : vector<8x2xf32>
    %66 = tpu.matmul %64, %65, %cst_22 {dimension_numbers = #tpu.dot_dimension_numbers<[1], [0], [0], [1], [0, 0, 1, 1], [], []>} : vector<8x16xf32>, vector<16x2xf32>, vector<8x2xf32> -> vector<8x2xf32>
    %67 = vector.broadcast %8 : vector<1x2xf32> to vector<8x2xf32>
    %68 = arith.addf %66, %67 : vector<8x2xf32>
    %cst_23 = arith.constant dense<0xFF800000> : vector<8xf32>
    %69 = vector.multi_reduction <maximumf>, %68, %cst_23 [1] : vector<8x2xf32> to vector<8xf32>
    %70 = vector.shape_cast %69 : vector<8xf32> to vector<8x1xf32>
    %71 = vector.broadcast %70 : vector<8x1xf32> to vector<8x2xf32>
    %72 = arith.subf %68, %71 : vector<8x2xf32>
    %73 = math.exp %72 : vector<8x2xf32>
    %cst_24 = arith.constant dense<0.000000e+00> : vector<8xf32>
    %74 = vector.multi_reduction <add>, %73, %cst_24 [1] : vector<8x2xf32> to vector<8xf32>
    %75 = vector.shape_cast %74 : vector<8xf32> to vector<8x1xf32>
    %76 = tpu.reciprocal %75 : vector<8x1xf32> -> vector<8x1xf32>
    %77 = vector.broadcast %76 : vector<8x1xf32> to vector<8x2xf32>
    %78 = arith.mulf %73, %77 : vector<8x2xf32>
    %c0_25 = arith.constant 0 : index
    %c0_26 = arith.constant 0 : index
    %79 = vector.load %arg5[%c0_25, %c0_26] : memref<8x2xf32, #tpu.memory_space<vmem>>, vector<8x2xf32>
    tpu.vector_store %arg5[%c0_25, %c0_26], %78 {strides = array<i32>} : memref<8x2xf32, #tpu.memory_space<vmem>>, vector<8x2xf32>,
    return
  }
}

</mosaic_0001>

<llo_original>
// kernel: mc_reinforce_forward.1
$region0: #{mc_reinforce_forward.1}
  #allocation0 [shape = 'u32[]', space=smem, size = 0x4, offset = 0x4, fixed_abs, tag = 'smem constant byte address 0x4 - core index']
  #allocation1 [shape = 'u32[144,128]{1,0:T(1,128)}', space=vmem, size = 0x12000, scoped, tag = 'internal scratch']
  %s0 = inlined_call_operand.vmem [shape: f32[8,4], index: 0, kind: input, shape index: {}]
  %s1 = inlined_call_operand.vmem [shape: f32[4,32], index: 1, kind: input, shape index: {}]
  %s2 = inlined_call_operand.vmem [shape: f32[32,16], index: 2, kind: input, shape index: {}]
  %s3 = inlined_call_operand.vmem [shape: f32[16,2], index: 3, kind: input, shape index: {}]
  %s4 = inlined_call_operand.vmem [shape: f32[7,32], index: 4, kind: input, shape index: {}]
  %s5 = inlined_call_operand.vmem [shape: f32[8,2], index: 5, kind: output, shape index: {}]
  %s6 = sld [smem:[#allocation0]]
  $region30: #{mc_reinforce_forward.1} parent=0
    _
  %s8 = ssub.s32 1, %s6
  %s9 = scalar_select 0, %s8, %s6
  // Predicated region
  $region2: #{mc_reinforce_forward.1} parent=0 // pred_check
    _
  $region3: #{mc_reinforce_forward.1} parent=0 // pred_check_branch
    %11 = sbr.rel (0) target = $region5
  $region4: #{mc_reinforce_forward.1} parent=0 // pred_region
    _
  $region5: #{mc_reinforce_forward.1} parent=0 // pred_fallthru
    _
  // Predicated region
  $region6: #{mc_reinforce_forward.1} parent=0 // pred_check
    _
  $region7: #{mc_reinforce_forward.1} parent=0 // pred_check_branch
    %13 = sbr.rel (0) target = $region9
  $region8: #{mc_reinforce_forward.1} parent=0 // pred_region
    _
  $region9: #{mc_reinforce_forward.1} parent=0 // pred_fallthru
    _
  // Predicated region
  $region10: #{mc_reinforce_forward.1} parent=0 // pred_check
    _
  $region11: #{mc_reinforce_forward.1} parent=0 // pred_check_branch
    %15 = sbr.rel (0) target = $region13
  $region12: #{mc_reinforce_forward.1} parent=0 // pred_region
    _
  $region13: #{mc_reinforce_forward.1} parent=0 // pred_fallthru
    _
  // Predicated region
  $region14: #{mc_reinforce_forward.1} parent=0 // pred_check
    _
  $region15: #{mc_reinforce_forward.1} parent=0 // pred_check_branch
    %17 = sbr.rel (0) target = $region17
  $region16: #{mc_reinforce_forward.1} parent=0 // pred_region
    _
  $region17: #{mc_reinforce_forward.1} parent=0 // pred_fallthru
    _
  // Predicated region
  $region18: #{mc_reinforce_forward.1} parent=0 // pred_check
    _
  $region19: #{mc_reinforce_forward.1} parent=0 // pred_check_branch
    %19 = sbr.rel (0) target = $region21
  $region20: #{mc_reinforce_forward.1} parent=0 // pred_region
    _
  $region21: #{mc_reinforce_forward.1} parent=0 // pred_fallthru
    _
  %v20 = vld [vmem:[%s0] sm:$0xff]
  %v21 = vld [vmem:[%s4] sm:$0x7f]
  %v22 = vld [vmem:[%s1] sm:$0xf]
  %v23 = vlaneseq
  %v24 = vshrl.u32 %v23, 7
  %v25 = vsub.s32 0, %v24
  %v26 = vrot.slane %v21, %v25
  %vm27 = vcmask 31744
  %v29 = vsel %vm27, %v20, 0
  %vm31 = vcmask 1043456
  %v33 = vsel %vm31, %v22, 0
  %35 = vmatprep.subr.mxu0 0.0
  %36 = vmatpush1.msra.mxu0 %v33
  %37 = vmatprep.subr.mxu0 0.0
  %38 = vmatpush1.msra.mxu0 0.0
  %39 = vmatprep.subr.mxu0 0.0
  %40 = vmatpush1.msra.mxu0 0.0
  %41 = vmatprep.subr.mxu0 0.0
  %42 = vmatpush1.msra.mxu0 0.0
  %43 = vmatprep.subr.mxu0 0.0
  %44 = vmatpush1.msra.mxu0 0.0
  %45 = vmatprep.subr.mxu0 0.0
  %46 = vmatpush1.msra.mxu0 0.0
  %47 = vmatprep.subr.mxu0 0.0
  %48 = vmatpush1.msra.mxu0 0.0
  %49 = vmatprep.subr.mxu0 0.0
  %50 = vmatpush1.msra.mxu0 0.0
  %51 = vmatprep.subr.mxu0 0.0
  %52 = vmatpush1.msra.mxu0 0.0
  %53 = vmatprep.subr.mxu0 0.0
  %54 = vmatpush1.msra.mxu0 0.0
  %55 = vmatprep.subr.mxu0 0.0
  %56 = vmatpush1.msra.mxu0 0.0
  %57 = vmatprep.subr.mxu0 0.0
  %58 = vmatpush1.msra.mxu0 0.0
  %59 = vmatprep.subr.mxu0 0.0
  %60 = vmatpush1.msra.mxu0 0.0
  %61 = vmatprep.subr.mxu0 0.0
  %62 = vmatpush1.msra.mxu0 0.0
  %63 = vmatprep.subr.mxu0 0.0
  %64 = vmatpush1.msra.mxu0 0.0
  %65 = vmatprep.subr.mxu0 0.0
  %66 = vmatpush1.msra.mxu0 0.0
  %67 = vmatprep.subr.mxu0 0.0
  %68 = vmatpush1.msra.mxu0 0.0
  %69 = vmatprep.subr.mxu0 0.0
  %70 = vmatpush1.msra.mxu0 0.0
  %71 = vmatprep.subr.mxu0 0.0
  %72 = vmatpush1.msra.mxu0 0.0
  %73 = vmatprep.subr.mxu0 0.0
  %74 = vmatpush1.msra.mxu0 0.0
  %75 = vmatprep.subr.mxu0 0.0
  %76 = vmatpush1.msra.mxu0 0.0
  %77 = vmatprep.subr.mxu0 0.0
  %78 = vmatpush1.msra.mxu0 0.0
  %79 = vmatprep.subr.mxu0 0.0
  %80 = vmatpush1.msra.mxu0 0.0
  %81 = vmatprep.subr.mxu0 0.0
  %82 = vmatpush1.msra.mxu0 0.0
  %83 = vmatprep.subr.mxu0 0.0
  %84 = vmatpush1.msra.mxu0 0.0
  %85 = vmatprep.subr.mxu0 0.0
  %86 = vmatpush1.msra.mxu0 0.0
  %87 = vmatprep.subr.mxu0 0.0
  %88 = vmatpush1.msra.mxu0 0.0
  %89 = vmatprep.subr.mxu0 0.0
  %90 = vmatpush1.msra.mxu0 0.0
  %91 = vmatprep.subr.mxu0 0.0
  %92 = vmatpush1.msra.mxu0 0.0
  %93 = vmatprep.subr.mxu0 0.0
  %94 = vmatpush1.msra.mxu0 0.0
  %95 = vmatprep.subr.mxu0 0.0
  %96 = vmatpush1.msra.mxu0 0.0
  %97 = vmatprep.subr.mxu0 0.0
  %98 = vmatpush1.msra.mxu0 0.0
  %99 = vmatprep.mubr.f32.mxu0 0.0
  %100 = vmatmul.mubr.f32.gmra.mrb[0].mxu0 %v29
  %v101 = vpop.f32.mrb[0].mxu0
  %v102 = vadd.f32 %v26, %v101
  %v103 = vpop.f32.mrb[0].mxu0
  %104 = vdwg.mxu0
  %vm105 = vcmask 261120
  %v106 = vsel %vm105, %v102, 0.0
  %v107 = vrot.slane %v106, 4
  %v108 = vadd.f32 %v106, %v107
  %v109 = vrot.slane %v108, 2
  %v110 = vadd.f32 %v108, %v109
  %v111 = vrot.slane %v110, 1
  %v112 = vadd.f32 %v110, %v111
  %v113 = vrcp.pop 8.0
  %v114 = vmul.f32 %v112, %v113
  %v115 = vmul.f32 %v102, %v102
  %v116 = vsel %vm105, %v115, 0.0
  %v117 = vrot.slane %v116, 4
  %v118 = vadd.f32 %v116, %v117
  %v119 = vrot.slane %v118, 2
  %v120 = vadd.f32 %v118, %v119
  %v121 = vrot.slane %v120, 1
  %v122 = vadd.f32 %v120, %v121
  %v123 = vmul.f32 %v122, %v113
  %v124 = vmul.f32 %v114, %v114
  %v125 = vsub.f32 %v123, %v124
  %v126 = vsub.f32 %v102, %v114
  %v127 = vadd.f32 %v125, 1e-05
  %v128 = vrsqrt.pop %v127
  %v129 = vmul.f32 %v126, %v128
  %v130 = vlaneseq
  %v131 = vshrl.u32 %v130, 7
  %v132 = vsub.s32 1, %v131
  %v133 = vrot.slane %v21, %v132
  %v134 = vmul.f32 %v129, %v133
  %v135 = vlaneseq
  %v136 = vshrl.u32 %v135, 7
  %v137 = vsub.s32 2, %v136
  %v138 = vrot.slane %v21, %v137
  %v139 = vadd.f32 %v134, %v138
  %v140 = vmax.f32 %v139, 0.0
  %v141 = vld [vmem:[%s2] sm:$0xff]
  %v142 = vld [vmem:[%s2 + $0x8] sm:$0xff]
  %v143 = vld [vmem:[%s2 + $0x10] sm:$0xff]
  %v144 = vld [vmem:[%s2 + $0x18] sm:$0xff]
  %v145 = vlaneseq
  %v146 = vshrl.u32 %v145, 7
  %v147 = vsub.s32 3, %v146
  %v148 = vrot.slane %v21, %v147
  %v150 = vsel %vm105, %v140, 0
  %152 = vmatprep.subr.mxu0 0.0
  %153 = vmatpush1.msra.mxu0 %v141
  %154 = vmatprep.subr.mxu0 0.0
  %155 = vmatpush1.msra.mxu0 %v142
  %156 = vmatprep.subr.mxu0 0.0
  %157 = vmatpush1.msra.mxu0 %v143
  %158 = vmatprep.subr.mxu0 0.0
  %159 = vmatpush1.msra.mxu0 %v144
  %160 = vmatprep.subr.mxu0 0.0
  %161 = vmatpush1.msra.mxu0 0.0
  %162 = vmatprep.subr.mxu0 0.0
  %163 = vmatpush1.msra.mxu0 0.0
  %164 = vmatprep.subr.mxu0 0.0
  %165 = vmatpush1.msra.mxu0 0.0
  %166 = vmatprep.subr.mxu0 0.0
  %167 = vmatpush1.msra.mxu0 0.0
  %168 = vmatprep.subr.mxu0 0.0
  %169 = vmatpush1.msra.mxu0 0.0
  %170 = vmatprep.subr.mxu0 0.0
  %171 = vmatpush1.msra.mxu0 0.0
  %172 = vmatprep.subr.mxu0 0.0
  %173 = vmatpush1.msra.mxu0 0.0
  %174 = vmatprep.subr.mxu0 0.0
  %175 = vmatpush1.msra.mxu0 0.0
  %176 = vmatprep.subr.mxu0 0.0
  %177 = vmatpush1.msra.mxu0 0.0
  %178 = vmatprep.subr.mxu0 0.0
  %179 = vmatpush1.msra.mxu0 0.0
  %180 = vmatprep.subr.mxu0 0.0
  %181 = vmatpush1.msra.mxu0 0.0
  %182 = vmatprep.subr.mxu0 0.0
  %183 = vmatpush1.msra.mxu0 0.0
  %184 = vmatprep.subr.mxu0 0.0
  %185 = vmatpush1.msra.mxu0 0.0
  %186 = vmatprep.subr.mxu0 0.0
  %187 = vmatpush1.msra.mxu0 0.0
  %188 = vmatprep.subr.mxu0 0.0
  %189 = vmatpush1.msra.mxu0 0.0
  %190 = vmatprep.subr.mxu0 0.0
  %191 = vmatpush1.msra.mxu0 0.0
  %192 = vmatprep.subr.mxu0 0.0
  %193 = vmatpush1.msra.mxu0 0.0
  %194 = vmatprep.subr.mxu0 0.0
  %195 = vmatpush1.msra.mxu0 0.0
  %196 = vmatprep.subr.mxu0 0.0
  %197 = vmatpush1.msra.mxu0 0.0
  %198 = vmatprep.subr.mxu0 0.0
  %199 = vmatpush1.msra.mxu0 0.0
  %200 = vmatprep.subr.mxu0 0.0
  %201 = vmatpush1.msra.mxu0 0.0
  %202 = vmatprep.subr.mxu0 0.0
  %203 = vmatpush1.msra.mxu0 0.0
  %204 = vmatprep.subr.mxu0 0.0
  %205 = vmatpush1.msra.mxu0 0.0
  %206 = vmatprep.subr.mxu0 0.0
  %207 = vmatpush1.msra.mxu0 0.0
  %208 = vmatprep.subr.mxu0 0.0
  %209 = vmatpush1.msra.mxu0 0.0
  %210 = vmatprep.subr.mxu0 0.0
  %211 = vmatpush1.msra.mxu0 0.0
  %212 = vmatprep.subr.mxu0 0.0
  %213 = vmatpush1.msra.mxu0 0.0
  %214 = vmatprep.subr.mxu0 0.0
  %215 = vmatpush1.msra.mxu0 0.0
  %216 = vmatprep.mubr.f32.mxu0 0.0
  %217 = vmatmul.mubr.f32.gmra.mrb[0].mxu0 %v150
  %v218 = vpop.f32.mrb[0].mxu0
  %v219 = vadd.f32 %v148, %v218
  %v220 = vpop.f32.mrb[0].mxu0
  %221 = vdwg.mxu0
  %vm222 = vcmask 130048
  %v223 = vsel %vm222, %v219, 0.0
  %v224 = vrot.slane %v223, 4
  %v225 = vadd.f32 %v223, %v224
  %v226 = vrot.slane %v225, 2
  %v227 = vadd.f32 %v225, %v226
  %v228 = vrot.slane %v227, 1
  %v229 = vadd.f32 %v227, %v228
  %v230 = vmul.f32 %v229, %v113
  %v231 = vmul.f32 %v219, %v219
  %v232 = vsel %vm222, %v231, 0.0
  %v233 = vrot.slane %v232, 4
  %v234 = vadd.f32 %v232, %v233
  %v235 = vrot.slane %v234, 2
  %v236 = vadd.f32 %v234, %v235
  %v237 = vrot.slane %v236, 1
  %v238 = vadd.f32 %v236, %v237
  %v239 = vmul.f32 %v238, %v113
  %v240 = vmul.f32 %v230, %v230
  %v241 = vsub.f32 %v239, %v240
  %v242 = vsub.f32 %v219, %v230
  %v243 = vadd.f32 %v241, 1e-05
  %v244 = vrsqrt.pop %v243
  %v245 = vmul.f32 %v242, %v244
  %v246 = vlaneseq
  %v247 = vshrl.u32 %v246, 7
  %v248 = vsub.s32 4, %v247
  %v249 = vrot.slane %v21, %v248
  %v250 = vmul.f32 %v245, %v249
  %v251 = vlaneseq
  %v252 = vshrl.u32 %v251, 7
  %v253 = vsub.s32 5, %v252
  %v254 = vrot.slane %v21, %v253
  %v255 = vadd.f32 %v250, %v254
  %v256 = vmax.f32 %v255, 0.0
  %v257 = vld [vmem:[%s3] sm:$0xff]
  %v258 = vld [vmem:[%s3 + $0x8] sm:$0xff]
  %v259 = vlaneseq
  %v260 = vshrl.u32 %v259, 7
  %v261 = vsub.s32 6, %v260
  %v262 = vrot.slane %v21, %v261
  %v264 = vsel %vm222, %v256, 0
  %266 = vmatprep.subr.mxu0 0.0
  %267 = vmatpush1.msra.mxu0 %v257
  %268 = vmatprep.subr.mxu0 0.0
  %269 = vmatpush1.msra.mxu0 %v258
  %270 = vmatprep.subr.mxu0 0.0
  %271 = vmatpush1.msra.mxu0 0.0
  %272 = vmatprep.subr.mxu0 0.0
  %273 = vmatpush1.msra.mxu0 0.0
  %274 = vmatprep.subr.mxu0 0.0
  %275 = vmatpush1.msra.mxu0 0.0
  %276 = vmatprep.subr.mxu0 0.0
  %277 = vmatpush1.msra.mxu0 0.0
  %278 = vmatprep.subr.mxu0 0.0
  %279 = vmatpush1.msra.mxu0 0.0
  %280 = vmatprep.subr.mxu0 0.0
  %281 = vmatpush1.msra.mxu0 0.0
  %282 = vmatprep.subr.mxu0 0.0
  %283 = vmatpush1.msra.mxu0 0.0
  %284 = vmatprep.subr.mxu0 0.0
  %285 = vmatpush1.msra.mxu0 0.0
  %286 = vmatprep.subr.mxu0 0.0
  %287 = vmatpush1.msra.mxu0 0.0
  %288 = vmatprep.subr.mxu0 0.0
  %289 = vmatpush1.msra.mxu0 0.0
  %290 = vmatprep.subr.mxu0 0.0
  %291 = vmatpush1.msra.mxu0 0.0
  %292 = vmatprep.subr.mxu0 0.0
  %293 = vmatpush1.msra.mxu0 0.0
  %294 = vmatprep.subr.mxu0 0.0
  %295 = vmatpush1.msra.mxu0 0.0
  %296 = vmatprep.subr.mxu0 0.0
  %297 = vmatpush1.msra.mxu0 0.0
  %298 = vmatprep.subr.mxu0 0.0
  %299 = vmatpush1.msra.mxu0 0.0
  %300 = vmatprep.subr.mxu0 0.0
  %301 = vmatpush1.msra.mxu0 0.0
  %302 = vmatprep.subr.mxu0 0.0
  %303 = vmatpush1.msra.mxu0 0.0
  %304 = vmatprep.subr.mxu0 0.0
  %305 = vmatpush1.msra.mxu0 0.0
  %306 = vmatprep.subr.mxu0 0.0
  %307 = vmatpush1.msra.mxu0 0.0
  %308 = vmatprep.subr.mxu0 0.0
  %309 = vmatpush1.msra.mxu0 0.0
  %310 = vmatprep.subr.mxu0 0.0
  %311 = vmatpush1.msra.mxu0 0.0
  %312 = vmatprep.subr.mxu0 0.0
  %313 = vmatpush1.msra.mxu0 0.0
  %314 = vmatprep.subr.mxu0 0.0
  %315 = vmatpush1.msra.mxu0 0.0
  %316 = vmatprep.subr.mxu0 0.0
  %317 = vmatpush1.msra.mxu0 0.0
  %318 = vmatprep.subr.mxu0 0.0
  %319 = vmatpush1.msra.mxu0 0.0
  %320 = vmatprep.subr.mxu0 0.0
  %321 = vmatpush1.msra.mxu0 0.0
  %322 = vmatprep.subr.mxu0 0.0
  %323 = vmatpush1.msra.mxu0 0.0
  %324 = vmatprep.subr.mxu0 0.0
  %325 = vmatpush1.msra.mxu0 0.0
  %326 = vmatprep.subr.mxu0 0.0
  %327 = vmatpush1.msra.mxu0 0.0
  %328 = vmatprep.subr.mxu0 0.0
  %329 = vmatpush1.msra.mxu0 0.0
  %330 = vmatprep.mubr.f32.mxu0 0.0
  %331 = vmatmul.mubr.f32.gmra.mrb[0].mxu0 %v264
  %v332 = vpop.f32.mrb[0].mxu0
  %v333 = vadd.f32 %v262, %v332
  %v334 = vpop.f32.mrb[0].mxu0
  %335 = vdwg.mxu0
  %vm336 = vcmask 15360
  %v337 = vsel %vm336, %v333, -inf
  %338 = vmax.xlane.f32.xlu0 %v337
  %v339 = vpop.xlane.xlu0 %338
  %v340 = vsub.f32 %v333, %v339
  %v341 = vmul.f32 %v340, 1.442695
  %v342 = vpow.pop %v341
  %v343 = vsel %vm336, %v342, 0.0
  %344 = vadd.xlane.f32.xlu0 %v343
  %v345 = vpop.xlane.xlu0 %344
  %v346 = vrcp.pop %v345
  %v347 = vmul.f32 %v342, %v346
  %348 = vst.msk [vmem:[%s5] sm:$0xff] %vm336, %v347
  // Predicated region
  $region22: #{mc_reinforce_forward.1} parent=0 // pred_check
    _
  $region23: #{mc_reinforce_forward.1} parent=0 // pred_check_branch
    %350 = sbr.rel (0) target = $region25
  $region24: #{mc_reinforce_forward.1} parent=0 // pred_region
    _
  $region25: #{mc_reinforce_forward.1} parent=0 // pred_fallthru
    _
  // Predicated region
  $region26: #{mc_reinforce_forward.1} parent=0 // pred_check
    _
  $region27: #{mc_reinforce_forward.1} parent=0 // pred_check_branch
    %352 = sbr.rel (0) target = $region29
  $region28: #{mc_reinforce_forward.1} parent=0 // pred_region
    _
  $region29: #{mc_reinforce_forward.1} parent=0 // pred_fallthru
    _

</llo_original>
